<compile_context>
chip_gen: v7x
topology: tpu7x:2x2x1
jax: 0.10.0
libtpu: 0.0.40
codegen_flags: <defaults>
</compile_context>

<pallas_src>
import functools

import jax
import jax.numpy as jnp
from jax.experimental import pallas as pl
from jax.experimental.pallas import tpu as pltpu


def _round_up(x, m):
    return (x + m - 1) // m * m


def rnn_kernel(xg_ref, slab_ref, h0_ref, c0_ref, packed_ref, h_state, c_state,
               *, num_layers, hsz, offs):
    L, H = num_layers, hsz
    G = 4 * H
    B = xg_ref.shape[1]

    # Seed the recurrent state from h0/c0 on the first timestep; afterwards it
    # lives purely in VMEM scratch (no HBM round-trip per step).
    @pl.when(pl.program_id(0) == 0)
    def _():
        h_state[...] = h0_ref[...]
        c_state[...] = c0_ref[...]

    bias_all = slab_ref[offs["bias"]:offs["bias"] + L, :G]          # (L, 4H)

    # Lane mask for the g gate, hoisted out of the (unrolled) layer loop.
    lane = jax.lax.broadcasted_iota(jnp.int32, (B, G), 1)
    is_g = (lane >= 2 * H) & (lane < 3 * H)

    def cell_update(l, gates):
        # Single EUP pass: i/f/o pre-activations were pre-scaled by 0.5, so
        # sigmoid(x) = 0.5*tanh(x/2) + 0.5 reuses the same tanh result.
        t = jnp.tanh(gates)
        act = jnp.where(is_g, t, 0.5 * t + 0.5)
        i_g = act[:, 0 * H:1 * H]
        f_g = act[:, 1 * H:2 * H]
        g_g = act[:, 2 * H:3 * H]
        o_g = act[:, 3 * H:4 * H]
        c_new = f_g * c_state[l] + i_g * g_g
        h_new = o_g * jnp.tanh(c_new)
        h_state[l] = h_new
        c_state[l] = c_new
        return h_new, c_new

    # Layer 0: embedding + input projection arrive precomputed as (B, 4H);
    # only the recurrent matmul remains (K = H, N = 4H).
    wh0 = slab_ref[offs["wh0"]:offs["wh0"] + H, :G]
    gates0 = (xg_ref[0]
              + jnp.dot(h_state[0], wh0, preferred_element_type=jnp.float32)
              + bias_all[0:1])
    h_new, c_new = cell_update(0, gates0)
    h_list, c_list = [h_new], [c_new]
    x_in = h_new

    # Layers 1..L-1: two K=H matmuls (no lane-axis concat of [x, h]).
    for l in range(1, L):
        base = offs["w_rest"] + (l - 1) * 2 * H
        w_ih = slab_ref[base:base + H, :G]
        w_hh = slab_ref[base + H:base + 2 * H, :G]
        gates = (jnp.dot(x_in, w_ih, preferred_element_type=jnp.float32)
                 + jnp.dot(h_state[l], w_hh, preferred_element_type=jnp.float32)
                 + bias_all[l:l + 1])
        h_new, c_new = cell_update(l, gates)
        h_list.append(h_new)
        c_list.append(c_new)
        x_in = h_new

    # FC head: weights zero-padded to a full 128-lane multiple so the packed
    # store below is fully unmasked.
    fcw = slab_ref[offs["fcw"]:offs["fcw"] + H, :]                  # (H, lanes)
    fcb = slab_ref[offs["fcb"]:offs["fcb"] + 1, :]                  # (1, lanes)
    logits = jnp.dot(x_in, fcw, preferred_element_type=jnp.float32) + fcb

    # One lane-dense packed store per step: [h_0..h_{L-1} | c_0..c_{L-1} | logits_pad].
    packed_ref[0] = jnp.concatenate(h_list + c_list + [logits], axis=1)


def prepare_params(params):
    """One-time host-side weight prep (hoisted out of the per-call path)."""
    num_layers, four_h, hsz = params["w_ih"].shape
    out_size = params["fc_w"].shape[0]
    assert four_h == 4 * hsz

    # Pre-scale i/f/o gate columns by 0.5 so the kernel needs a single tanh pass:
    #   sigmoid(x) = 0.5 * tanh(x / 2) + 0.5   (PyTorch gate order: i, f, g, o).
    gate_scale = jnp.concatenate([
        jnp.full((hsz,), 0.5, jnp.float32),
        jnp.full((hsz,), 0.5, jnp.float32),
        jnp.ones((hsz,), jnp.float32),
        jnp.full((hsz,), 0.5, jnp.float32)])

    w_ih_t = jnp.swapaxes(params["w_ih"], -1, -2) * gate_scale      # (L, H, 4H)
    w_hh_t = jnp.swapaxes(params["w_hh"], -1, -2) * gate_scale      # (L, H, 4H)
    bias = (params["b_ih"] + params["b_hh"]) * gate_scale           # (L, 4H)

    # Fold the embedding into layer 0's (pre-scaled) input weights: (VOCAB, 4H).
    e_fold = jnp.dot(params["embed"], w_ih_t[0])

    # Pack every weight into ONE lane-dense slab (single DMA, stays VMEM-resident
    # across the timestep grid). Each section starts on an 8-row boundary.
    lanes = max(4 * hsz, _round_up(out_size, 128))

    def pad_lanes(a):
        pad = lanes - a.shape[-1]
        return a if pad == 0 else jnp.pad(a, ((0, 0), (0, pad)))

    sections, offs, row = [], {}, 0

    def add(name, mat):
        nonlocal row
        offs[name] = row
        sections.append(pad_lanes(mat.astype(jnp.float32)))
        row += mat.shape[0]
        pad = _round_up(row, 8) - row
        if pad:
            sections.append(jnp.zeros((pad, lanes), jnp.float32))
            row += pad

    add("wh0", w_hh_t[0])                                           # (H, 4H)
    if num_layers > 1:
        w_rest = jnp.concatenate(
            [jnp.concatenate([w_ih_t[l], w_hh_t[l]], axis=0)
             for l in range(1, num_layers)], axis=0)                # ((L-1)*2H, 4H)
        add("w_rest", w_rest)
    else:
        offs["w_rest"] = row                                        # no dummy tensor
    add("bias", bias)                                               # (L, 4H)
    add("fcw", params["fc_w"].T)                                    # (H, OUT) padded
    add("fcb", params["fc_b"].reshape(1, -1))                       # (1, OUT) padded
    slab = jnp.concatenate(sections, axis=0)                        # (R, lanes)

    return {
        "e_fold": e_fold, "slab": slab, "offs": offs,
        "num_layers": num_layers, "hidden_size": hsz,
        "out_size": out_size, "lanes": lanes,
    }


def rnn_sequence(tokens_tb, hidden, cell, prep):
    """Run T teacher-forced LSTM steps. tokens_tb: (T, B) int32."""
    L, H = prep["num_layers"], prep["hidden_size"]
    out_size, lanes = prep["out_size"], prep["lanes"]
    T, B = tokens_tb.shape
    packed_width = 2 * L * H + lanes
    slab = prep["slab"]

    # Embedding lookup + layer-0 input projection as one gather of the folded,
    # pre-scaled table; streamed to the kernel one (B, 4H) block per step.
    x_gates0 = jnp.take(prep["e_fold"], tokens_tb, axis=0)          # (T, B, 4H)

    grid_spec = pltpu.PrefetchScalarGridSpec(
        num_scalar_prefetch=0,
        grid=(T,),
        in_specs=[
            pl.BlockSpec((1, B, 4 * H), lambda t: (t, 0, 0)),        # per-step x gates
            pl.BlockSpec(slab.shape, lambda t: (0, 0)),              # resident weights
            pl.BlockSpec((L, B, H), lambda t: (0, 0, 0)),            # h0 (read at t==0)
            pl.BlockSpec((L, B, H), lambda t: (0, 0, 0)),            # c0 (read at t==0)
        ],
        out_specs=pl.BlockSpec((1, B, packed_width), lambda t: (t, 0, 0)),
        scratch_shapes=[pltpu.VMEM((L, B, H), jnp.float32),          # h state carry
                        pltpu.VMEM((L, B, H), jnp.float32)],         # c state carry
    )

    # VMEM budget derived from the actual footprint (4x headroom, 4 MiB floor).
    vmem_bytes = 4 * (slab.size + 2 * B * 4 * H + 2 * L * B * H
                      + 2 * B * packed_width + 2 * L * B * H)
    vmem_limit = max(4 * vmem_bytes, 4 * 1024 * 1024)

    packed = pl.pallas_call(
        functools.partial(rnn_kernel, num_layers=L, hsz=H, offs=prep["offs"]),
        out_shape=jax.ShapeDtypeStruct((T, B, packed_width), jnp.float32),
        grid_spec=grid_spec,
        compiler_params=pltpu.CompilerParams(
            dimension_semantics=("arbitrary",),     # sequential state carry
            vmem_limit_bytes=vmem_limit),
    )(x_gates0, slab, hidden, cell)

    logits = packed[:, :, 2 * L * H:2 * L * H + out_size]            # (T, B, OUT)
    h_fin = packed[-1, :, :L * H].reshape(B, L, H).transpose(1, 0, 2)
    c_fin = packed[-1, :, L * H:2 * L * H].reshape(B, L, H).transpose(1, 0, 2)
    return logits, h_fin, c_fin


def rnn_forward(x_tokens, hidden, cell, prep):
    """Module-equivalent single-step forward: x_tokens (B,), hidden/cell (L,B,H)."""
    logits, h, c = rnn_sequence(x_tokens[None, :], hidden, cell, prep)
    return logits[0], h, c


def ref_forward(x_tokens, hidden, cell, params):
    """Pure-JAX reference matching torch semantics (seq_len == 1)."""
    num_layers = hidden.shape[0]
    x_in = params["embed"][x_tokens]
    h_new, c_new = [], []
    for l in range(num_layers):
        gates = (x_in @ params["w_ih"][l].T + params["b_ih"][l]
                 + hidden[l] @ params["w_hh"][l].T + params["b_hh"][l])
        i, f, g, o = jnp.split(gates, 4, axis=-1)
        i, f, o = jax.nn.sigmoid(i), jax.nn.sigmoid(f), jax.nn.sigmoid(o)
        g = jnp.tanh(g)
        c = f * cell[l] + i * g
        h = o * jnp.tanh(c)
        h_new.append(h)
        c_new.append(c)
        x_in = h
    logits = x_in @ params["fc_w"].T + params["fc_b"]
    return logits, jnp.stack(h_new), jnp.stack(c_new)


def ref_sequence(tokens_tb, hidden, cell, params):
    logits_all, h, c = [], hidden, cell
    for t in range(tokens_tb.shape[0]):
        lg, h, c = ref_forward(tokens_tb[t], h, c, params)
        logits_all.append(lg)
    return jnp.stack(logits_all), h, c


if __name__ == "__main__":
    # Small shapes implied by the module: tokens (B,), hidden/cell (L, B, H).
    VOCAB, H, L, OUT, B, T = 64, 32, 2, 64, 8, 4

    key = jax.random.PRNGKey(0)
    ks = jax.random.split(key, 11)
    params = {
        "embed": 0.1 * jax.random.normal(ks[0], (VOCAB, H), jnp.float32),
        "w_ih": 0.1 * jax.random.normal(ks[1], (L, 4 * H, H), jnp.float32),
        "w_hh": 0.1 * jax.random.normal(ks[2], (L, 4 * H, H), jnp.float32),
        "b_ih": 0.1 * jax.random.normal(ks[3], (L, 4 * H), jnp.float32),
        "b_hh": 0.1 * jax.random.normal(ks[4], (L, 4 * H), jnp.float32),
        "fc_w": 0.1 * jax.random.normal(ks[5], (OUT, H), jnp.float32),
        "fc_b": 0.1 * jax.random.normal(ks[6], (OUT,), jnp.float32),
    }

    x = jax.random.randint(ks[7], (B,), 0, VOCAB, dtype=jnp.int32)
    hidden = 0.1 * jax.random.normal(ks[8], (L, B, H), jnp.float32)
    cell = 0.1 * jax.random.normal(ks[9], (L, B, H), jnp.float32)

    prep = jax.block_until_ready(prepare_params(params))

    # Single-step (module-equivalent) check.
    logits, h_out, c_out = jax.block_until_ready(rnn_forward(x, hidden, cell, prep))
    logits_r, h_r, c_r = ref_forward(x, hidden, cell, params)
    assert jnp.allclose(logits, logits_r, atol=1e-5, rtol=1e-5)
    assert jnp.allclose(h_out, h_r, atol=1e-5, rtol=1e-5)
    assert jnp.allclose(c_out, c_r, atol=1e-5, rtol=1e-5)

    # Multi-step (teacher-forced) check: exercises the timestep grid with
    # VMEM-resident weights and the VMEM-scratch state carry.
    tokens = jax.random.randint(ks[10], (T, B), 0, VOCAB, dtype=jnp.int32)
    logits_seq, h_T, c_T = jax.block_until_ready(
        rnn_sequence(tokens, hidden, cell, prep))
    logits_seq_r, h_T_r, c_T_r = ref_sequence(tokens, hidden, cell, params)
    assert jnp.allclose(logits_seq, logits_seq_r, atol=1e-5, rtol=1e-5)
    assert jnp.allclose(h_T, h_T_r, atol=1e-5, rtol=1e-5)
    assert jnp.allclose(c_T, c_T_r, atol=1e-5, rtol=1e-5)

    print("KERNEL_OK")
</pallas_src>

<mosaic_0001>
module attributes {stable_mosaic.version = 11 : i64} {
  func.func @rnn_kernel(%arg0: i32, %arg1: memref<1x8x128xf32, #tpu.memory_space<vmem>>, %arg2: memref<144x128xf32, #tpu.memory_space<vmem>>, %arg3: memref<2x8x32xf32, #tpu.memory_space<vmem>>, %arg4: memref<2x8x32xf32, #tpu.memory_space<vmem>>, %arg5: memref<1x8x256xf32, #tpu.memory_space<vmem>>, %arg6: memref<2x8x32xf32, #tpu.memory_space<vmem>>, %arg7: memref<2x8x32xf32, #tpu.memory_space<vmem>>) attributes {dimension_semantics = [#tpu.dimension_semantics<arbitrary>], iteration_bounds = array<i64: 1>, scalar_prefetch = 0 : i64, scratch_operands = 2 : i64, tpu.core_type = #tpu.core_type<tc>, window_params = [{transform_indices = @transform_0, window_bounds = array<i64: 1, 8, 128>}, {pipeline_mode = #tpu.pipeline_mode<synchronous>, transform_indices = @transform_1, window_bounds = array<i64: 144, 128>}, {pipeline_mode = #tpu.pipeline_mode<synchronous>, transform_indices = @transform_2, window_bounds = array<i64: 2, 8, 32>}, {pipeline_mode = #tpu.pipeline_mode<synchronous>, transform_indices = @transform_3, window_bounds = array<i64: 2, 8, 32>}, {transform_indices = @transform_4, window_bounds = array<i64: 1, 8, 256>}]} {
    %c0_i32 = arith.constant 0 : i32
    %0 = arith.cmpi eq, %arg0, %c0_i32 : i32
    %1 = arith.extui %0 : i1 to i32
    %c0_i32_0 = arith.constant 0 : i32
    %2 = arith.cmpi ne, %1, %c0_i32_0 : i32
    scf.if %2 {
      %c0_43 = arith.constant 0 : index
      %c0_44 = arith.constant 0 : index
      %c0_45 = arith.constant 0 : index
      %85 = vector.load %arg3[%c0_43, %c0_44, %c0_45] : memref<2x8x32xf32, #tpu.memory_space<vmem>>, vector<2x8x32xf32>
      %c0_46 = arith.constant 0 : index
      %c0_47 = arith.constant 0 : index
      %c0_48 = arith.constant 0 : index
      %86 = vector.load %arg6[%c0_46, %c0_47, %c0_48] : memref<2x8x32xf32, #tpu.memory_space<vmem>>, vector<2x8x32xf32>
      tpu.vector_store %arg6[%c0_46, %c0_47, %c0_48], %85 {strides = array<i32>} : memref<2x8x32xf32, #tpu.memory_space<vmem>>, vector<2x8x32xf32>,
      %c0_49 = arith.constant 0 : index
      %c0_50 = arith.constant 0 : index
      %c0_51 = arith.constant 0 : index
      %87 = vector.load %arg4[%c0_49, %c0_50, %c0_51] : memref<2x8x32xf32, #tpu.memory_space<vmem>>, vector<2x8x32xf32>
      %c0_52 = arith.constant 0 : index
      %c0_53 = arith.constant 0 : index
      %c0_54 = arith.constant 0 : index
      %88 = vector.load %arg7[%c0_52, %c0_53, %c0_54] : memref<2x8x32xf32, #tpu.memory_space<vmem>>, vector<2x8x32xf32>
      tpu.vector_store %arg7[%c0_52, %c0_53, %c0_54], %87 {strides = array<i32>} : memref<2x8x32xf32, #tpu.memory_space<vmem>>, vector<2x8x32xf32>,
    } else {
    }
    %c96 = arith.constant 96 : index
    %c0 = arith.constant 0 : index
    %3 = vector.load %arg2[%c96, %c0] : memref<144x128xf32, #tpu.memory_space<vmem>>, vector<2x128xf32>
    %4 = tpu.iota {dimensions = array<i32: 1>} : vector<8x128xi32>
    %c64_i32 = arith.constant 64 : i32
    %5 = vector.broadcast %c64_i32 : i32 to vector<8x128xi32>
    %6 = arith.cmpi sge, %4, %5 : vector<8x128xi32>
    %c96_i32 = arith.constant 96 : i32
    %7 = vector.broadcast %c96_i32 : i32 to vector<8x128xi32>
    %8 = arith.cmpi slt, %4, %7 : vector<8x128xi32>
    %9 = arith.andi %6, %8 : vector<8x128xi1>
    %c0_1 = arith.constant 0 : index
    %c0_2 = arith.constant 0 : index
    %10 = vector.load %arg2[%c0_1, %c0_2] : memref<144x128xf32, #tpu.memory_space<vmem>>, vector<32x128xf32>
    %c0_3 = arith.constant 0 : index
    %c0_4 = arith.constant 0 : index
    %c0_5 = arith.constant 0 : index
    %11 = vector.load %arg1[%c0_3, %c0_4, %c0_5] : memref<1x8x128xf32, #tpu.memory_space<vmem>>, vector<1x8x128xf32>
    %12 = vector.shape_cast %11 : vector<1x8x128xf32> to vector<8x128xf32>
    %c0_6 = arith.constant 0 : index
    %c0_7 = arith.constant 0 : index
    %c0_8 = arith.constant 0 : index
    %13 = vector.load %arg6[%c0_6, %c0_7, %c0_8] : memref<2x8x32xf32, #tpu.memory_space<vmem>>, vector<1x8x32xf32>
    %14 = vector.shape_cast %13 : vector<1x8x32xf32> to vector<8x32xf32>
    %cst = arith.constant dense<0.000000e+00> : vector<8x128xf32>
    %15 = tpu.matmul %14, %10, %cst {dimension_numbers = #tpu.dot_dimension_numbers<[1], [0], [0], [1], [0, 0, 1, 1], [], []>} : vector<8x32xf32>, vector<32x128xf32>, vector<8x128xf32> -> vector<8x128xf32>
    %16 = arith.addf %12, %15 : vector<8x128xf32>
    %17 = vector.extract_strided_slice %3 {offsets = [0, 0], sizes = [1, 128], strides = [1, 1]} : vector<2x128xf32> to vector<1x128xf32>
    %18 = vector.broadcast %17 : vector<1x128xf32> to vector<8x128xf32>
    %19 = arith.addf %16, %18 : vector<8x128xf32>
    %20 = math.tanh %19 : vector<8x128xf32>
    %cst_9 = arith.constant 5.000000e-01 : f32
    %21 = vector.broadcast %cst_9 : f32 to vector<8x128xf32>
    %22 = arith.mulf %21, %20 : vector<8x128xf32>
    %cst_10 = arith.constant 5.000000e-01 : f32
    %23 = vector.broadcast %cst_10 : f32 to vector<8x128xf32>
    %24 = arith.addf %22, %23 : vector<8x128xf32>
    %25 = arith.select %9, %20, %24 : vector<8x128xi1>, vector<8x128xf32>
    %26 = vector.extract_strided_slice %25 {offsets = [0, 0], sizes = [8, 32], strides = [1, 1]} : vector<8x128xf32> to vector<8x32xf32>
    %27 = vector.extract_strided_slice %25 {offsets = [0, 32], sizes = [8, 32], strides = [1, 1]} : vector<8x128xf32> to vector<8x32xf32>
    %28 = vector.extract_strided_slice %25 {offsets = [0, 64], sizes = [8, 32], strides = [1, 1]} : vector<8x128xf32> to vector<8x32xf32>
    %29 = vector.extract_strided_slice %25 {offsets = [0, 96], sizes = [8, 32], strides = [1, 1]} : vector<8x128xf32> to vector<8x32xf32>
    %c0_11 = arith.constant 0 : index
    %c0_12 = arith.constant 0 : index
    %c0_13 = arith.constant 0 : index
    %30 = vector.load %arg7[%c0_11, %c0_12, %c0_13] : memref<2x8x32xf32, #tpu.memory_space<vmem>>, vector<1x8x32xf32>
    %31 = vector.shape_cast %30 : vector<1x8x32xf32> to vector<8x32xf32>
    %32 = arith.mulf %27, %31 : vector<8x32xf32>
    %33 = arith.mulf %26, %28 : vector<8x32xf32>
    %34 = arith.addf %32, %33 : vector<8x32xf32>
    %35 = math.tanh %34 : vector<8x32xf32>
    %36 = arith.mulf %29, %35 : vector<8x32xf32>
    %c0_14 = arith.constant 0 : index
    %c0_15 = arith.constant 0 : index
    %c0_16 = arith.constant 0 : index
    %37 = vector.load %arg6[%c0_14, %c0_15, %c0_16] : memref<2x8x32xf32, #tpu.memory_space<vmem>>, vector<1x8x32xf32>
    %38 = vector.shape_cast %37 : vector<1x8x32xf32> to vector<8x32xf32>
    %39 = vector.shape_cast %36 : vector<8x32xf32> to vector<1x8x32xf32>
    tpu.vector_store %arg6[%c0_14, %c0_15, %c0_16], %39 {strides = array<i32>} : memref<2x8x32xf32, #tpu.memory_space<vmem>>, vector<1x8x32xf32>,
    %c0_17 = arith.constant 0 : index
    %c0_18 = arith.constant 0 : index
    %c0_19 = arith.constant 0 : index
    %40 = vector.load %arg7[%c0_17, %c0_18, %c0_19] : memref<2x8x32xf32, #tpu.memory_space<vmem>>, vector<1x8x32xf32>
    %41 = vector.shape_cast %40 : vector<1x8x32xf32> to vector<8x32xf32>
    %42 = vector.shape_cast %34 : vector<8x32xf32> to vector<1x8x32xf32>
    tpu.vector_store %arg7[%c0_17, %c0_18, %c0_19], %42 {strides = array<i32>} : memref<2x8x32xf32, #tpu.memory_space<vmem>>, vector<1x8x32xf32>,
    %c32 = arith.constant 32 : index
    %c0_20 = arith.constant 0 : index
    %43 = vector.load %arg2[%c32, %c0_20] : memref<144x128xf32, #tpu.memory_space<vmem>>, vector<32x128xf32>
    %c64 = arith.constant 64 : index
    %c0_21 = arith.constant 0 : index
    %44 = vector.load %arg2[%c64, %c0_21] : memref<144x128xf32, #tpu.memory_space<vmem>>, vector<32x128xf32>
    %cst_22 = arith.constant dense<0.000000e+00> : vector<8x128xf32>
    %45 = tpu.matmul %36, %43, %cst_22 {dimension_numbers = #tpu.dot_dimension_numbers<[1], [0], [0], [1], [0, 0, 1, 1], [], []>} : vector<8x32xf32>, vector<32x128xf32>, vector<8x128xf32> -> vector<8x128xf32>
    %c1 = arith.constant 1 : index
    %c0_23 = arith.constant 0 : index
    %c0_24 = arith.constant 0 : index
    %46 = vector.load %arg6[%c1, %c0_23, %c0_24] : memref<2x8x32xf32, #tpu.memory_space<vmem>>, vector<1x8x32xf32>
    %47 = vector.shape_cast %46 : vector<1x8x32xf32> to vector<8x32xf32>
    %cst_25 = arith.constant dense<0.000000e+00> : vector<8x128xf32>
    %48 = tpu.matmul %47, %44, %cst_25 {dimension_numbers = #tpu.dot_dimension_numbers<[1], [0], [0], [1], [0, 0, 1, 1], [], []>} : vector<8x32xf32>, vector<32x128xf32>, vector<8x128xf32> -> vector<8x128xf32>
    %49 = arith.addf %45, %48 : vector<8x128xf32>
    %50 = vector.extract_strided_slice %3 {offsets = [1, 0], sizes = [1, 128], strides = [1, 1]} : vector<2x128xf32> to vector<1x128xf32>
    %51 = vector.broadcast %50 : vector<1x128xf32> to vector<8x128xf32>
    %52 = arith.addf %49, %51 : vector<8x128xf32>
    %53 = math.tanh %52 : vector<8x128xf32>
    %cst_26 = arith.constant 5.000000e-01 : f32
    %54 = vector.broadcast %cst_26 : f32 to vector<8x128xf32>
    %55 = arith.mulf %54, %53 : vector<8x128xf32>
    %cst_27 = arith.constant 5.000000e-01 : f32
    %56 = vector.broadcast %cst_27 : f32 to vector<8x128xf32>
    %57 = arith.addf %55, %56 : vector<8x128xf32>
    %58 = arith.select %9, %53, %57 : vector<8x128xi1>, vector<8x128xf32>
    %59 = vector.extract_strided_slice %58 {offsets = [0, 0], sizes = [8, 32], strides = [1, 1]} : vector<8x128xf32> to vector<8x32xf32>
    %60 = vector.extract_strided_slice %58 {offsets = [0, 32], sizes = [8, 32], strides = [1, 1]} : vector<8x128xf32> to vector<8x32xf32>
    %61 = vector.extract_strided_slice %58 {offsets = [0, 64], sizes = [8, 32], strides = [1, 1]} : vector<8x128xf32> to vector<8x32xf32>
    %62 = vector.extract_strided_slice %58 {offsets = [0, 96], sizes = [8, 32], strides = [1, 1]} : vector<8x128xf32> to vector<8x32xf32>
    %c1_28 = arith.constant 1 : index
    %c0_29 = arith.constant 0 : index
    %c0_30 = arith.constant 0 : index
    %63 = vector.load %arg7[%c1_28, %c0_29, %c0_30] : memref<2x8x32xf32, #tpu.memory_space<vmem>>, vector<1x8x32xf32>
    %64 = vector.shape_cast %63 : vector<1x8x32xf32> to vector<8x32xf32>
    %65 = arith.mulf %60, %64 : vector<8x32xf32>
    %66 = arith.mulf %59, %61 : vector<8x32xf32>
    %67 = arith.addf %65, %66 : vector<8x32xf32>
    %68 = math.tanh %67 : vector<8x32xf32>
    %69 = arith.mulf %62, %68 : vector<8x32xf32>
    %c1_31 = arith.constant 1 : index
    %c0_32 = arith.constant 0 : index
    %c0_33 = arith.constant 0 : index
    %70 = vector.load %arg6[%c1_31, %c0_32, %c0_33] : memref<2x8x32xf32, #tpu.memory_space<vmem>>, vector<1x8x32xf32>
    %71 = vector.shape_cast %70 : vector<1x8x32xf32> to vector<8x32xf32>
    %72 = vector.shape_cast %69 : vector<8x32xf32> to vector<1x8x32xf32>
    tpu.vector_store %arg6[%c1_31, %c0_32, %c0_33], %72 {strides = array<i32>} : memref<2x8x32xf32, #tpu.memory_space<vmem>>, vector<1x8x32xf32>,
    %c1_34 = arith.constant 1 : index
    %c0_35 = arith.constant 0 : index
    %c0_36 = arith.constant 0 : index
    %73 = vector.load %arg7[%c1_34, %c0_35, %c0_36] : memref<2x8x32xf32, #tpu.memory_space<vmem>>, vector<1x8x32xf32>
    %74 = vector.shape_cast %73 : vector<1x8x32xf32> to vector<8x32xf32>
    %75 = vector.shape_cast %67 : vector<8x32xf32> to vector<1x8x32xf32>
    tpu.vector_store %arg7[%c1_34, %c0_35, %c0_36], %75 {strides = array<i32>} : memref<2x8x32xf32, #tpu.memory_space<vmem>>, vector<1x8x32xf32>,
    %c104 = arith.constant 104 : index
    %c0_37 = arith.constant 0 : index
    %76 = vector.load %arg2[%c104, %c0_37] : memref<144x128xf32, #tpu.memory_space<vmem>>, vector<32x128xf32>
    %c136 = arith.constant 136 : index
    %c0_38 = arith.constant 0 : index
    %77 = vector.load %arg2[%c136, %c0_38] : memref<144x128xf32, #tpu.memory_space<vmem>>, vector<1x128xf32>
    %cst_39 = arith.constant dense<0.000000e+00> : vector<8x128xf32>
    %78 = tpu.matmul %69, %76, %cst_39 {dimension_numbers = #tpu.dot_dimension_numbers<[1], [0], [0], [1], [0, 0, 1, 1], [], []>} : vector<8x32xf32>, vector<32x128xf32>, vector<8x128xf32> -> vector<8x128xf32>
    %79 = vector.broadcast %77 : vector<1x128xf32> to vector<8x128xf32>
    %80 = arith.addf %78, %79 : vector<8x128xf32>
    %81 = tpu.concatenate %36, %69, %34, %67, %80 in 1 : vector<8x32xf32>, vector<8x32xf32>, vector<8x32xf32>, vector<8x32xf32>, vector<8x128xf32> -> vector<8x256xf32>
    %c0_40 = arith.constant 0 : index
    %c0_41 = arith.constant 0 : index
    %c0_42 = arith.constant 0 : index
    %82 = vector.load %arg5[%c0_40, %c0_41, %c0_42] : memref<1x8x256xf32, #tpu.memory_space<vmem>>, vector<1x8x256xf32>
    %83 = vector.shape_cast %82 : vector<1x8x256xf32> to vector<8x256xf32>
    %84 = vector.shape_cast %81 : vector<8x256xf32> to vector<1x8x256xf32>
    tpu.vector_store %arg5[%c0_40, %c0_41, %c0_42], %84 {strides = array<i32>} : memref<1x8x256xf32, #tpu.memory_space<vmem>>, vector<1x8x256xf32>,
    return
  }
  func.func @transform_0(%arg0: i32) -> (i32, i32, i32) {
    %c0_i32 = arith.constant 0 : i32
    %c0_i32_0 = arith.constant 0 : i32
    %c0_i32_1 = arith.constant 0 : i32
    return %arg0, %c0_i32, %c0_i32_0 : i32, i32, i32
  }
  func.func @transform_1(%arg0: i32) -> (i32, i32) {
    %c0_i32 = arith.constant 0 : i32
    %c0_i32_0 = arith.constant 0 : i32
    %c0_i32_1 = arith.constant 0 : i32
    return %c0_i32, %c0_i32_0 : i32, i32
  }
  func.func @transform_2(%arg0: i32) -> (i32, i32, i32) {
    %c0_i32 = arith.constant 0 : i32
    %c0_i32_0 = arith.constant 0 : i32
    %c0_i32_1 = arith.constant 0 : i32
    %c0_i32_2 = arith.constant 0 : i32
    return %c0_i32, %c0_i32_0, %c0_i32_1 : i32, i32, i32
  }
  func.func @transform_3(%arg0: i32) -> (i32, i32, i32) {
    %c0_i32 = arith.constant 0 : i32
    %c0_i32_0 = arith.constant 0 : i32
    %c0_i32_1 = arith.constant 0 : i32
    %c0_i32_2 = arith.constant 0 : i32
    return %c0_i32, %c0_i32_0, %c0_i32_1 : i32, i32, i32
  }
  func.func @transform_4(%arg0: i32) -> (i32, i32, i32) {
    %c0_i32 = arith.constant 0 : i32
    %c0_i32_0 = arith.constant 0 : i32
    %c0_i32_1 = arith.constant 0 : i32
    return %arg0, %c0_i32, %c0_i32_0 : i32, i32, i32
  }
}

</mosaic_0001>

<llo_original>
// kernel: tpu_custom_call.1
$region0: #{tpu_custom_call.1}
  #allocation0 [shape = 'u32[]', space=smem, size = 0x4, offset = 0x4, fixed_abs, tag = 'smem constant byte address 0x4 - core index']
  #allocation1 [shape = 'u32[144,128]{1,0:T(1,128)}', space=vmem, size = 0x12000, scoped, tag = 'internal scratch']
  #allocation2 [shape = 'f32[2,8,32]{2,1,0:T(8,128)}', space=vmem, size = 0x2000, scoped, tag = 'scratch operand']
  #allocation3 [shape = 'f32[2,8,32]{2,1,0:T(8,128)}', space=vmem, size = 0x2000, scoped, tag = 'scratch operand']
  %s0 = inlined_call_operand.hbm [shape: f32[1,8,128], index: 0, kind: input, shape index: {}]
  %s1 = inlined_call_operand.hbm [shape: f32[144,128], index: 1, kind: input, shape index: {}]
  %s2 = inlined_call_operand.hbm [shape: f32[2,8,32], index: 2, kind: input, shape index: {}]
  %s3 = inlined_call_operand.hbm [shape: f32[2,8,32], index: 3, kind: input, shape index: {}]
  %s4 = inlined_call_operand.hbm [shape: f32[1,8,256], index: 4, kind: output, shape index: {}]
  %s5 = sld [smem:[#allocation0]]
  $region46: #{tpu_custom_call.1} parent=0
    _
  %s7 = ssub.s32 1, %s5
  %s8 = scalar_select 0, %s7, %s5
  $region1: #{tpu_custom_call.1} parent=0
    #allocation4 [shape = 'u8[4096]{0}', space=vmem, size = 0x1000, scoped, tag = 'input window, operand 0, single buffered']
    #allocation5 [shape = 's32[1]{0}', space=sflag, size = 0x4, scoped, tag = 'scoped memory for tpu_custom_call.1']
    #allocation6 [shape = 's32[1]{0}', space=sflag, size = 0x4, scoped, tag = 'scoped memory for tpu_custom_call.1']
    #allocation7 [shape = 'u8[73728]{0}', space=vmem, size = 0x12000, scoped, tag = 'input window, operand 1, single buffered']
    #allocation8 [shape = 's32[1]{0}', space=sflag, size = 0x4, scoped, tag = 'scoped memory for tpu_custom_call.1']
    #allocation9 [shape = 'u8[8192]{0}', space=vmem, size = 0x2000, scoped, tag = 'input window, operand 2, single buffered']
    #allocation10 [shape = 'u8[8192]{0}', space=vmem, size = 0x2000, scoped, tag = 'input window, operand 3, single buffered']
    #allocation11 [shape = 's32[1]{0}', space=sflag, size = 0x4, scoped, tag = 'scoped memory for tpu_custom_call.1']
    #allocation12 [shape = 'u8[8192]{0}', space=vmem, size = 0x2000, scoped, tag = 'output window, operand 0, single buffered']
    %9 = vsyncpa [#allocation5], 0
    %10 = vsyncpa [#allocation8], 0
    %11 = vsyncpa [#allocation11], 0
    %12 = vsyncpa [#allocation6], 0
    // Predicated region
    $region2: #{tpu_custom_call.1} parent=1 // pred_check
      _
    $region3: #{tpu_custom_call.1} parent=1 // pred_check_branch
      %14 = sbr.rel (0) target = $region5
    $region4: #{tpu_custom_call.1} parent=1 // pred_region
      %s16 = ssub.s32 128, 128
      %17 = vsyncadd [#allocation5], %s16
      %s19 = sshll.u32 [#allocation4], 4
      %s20 = int_to_ptr.vmem [resolvable:$true] %s19
      %22 = dma.hbm_to_vmem [thread:$0]  %s0, 128, %s20, [#allocation5]
    $region5: #{tpu_custom_call.1} parent=1 // pred_fallthru
      _
    // Predicated region
    $region6: #{tpu_custom_call.1} parent=1 // pred_check
      _
    $region7: #{tpu_custom_call.1} parent=1 // pred_check_branch
      %24 = sbr.rel (0) target = $region9
    $region8: #{tpu_custom_call.1} parent=1 // pred_region
      %s26 = ssub.s32 2304, 2304
      %27 = vsyncadd [#allocation8], %s26
      %s28 = sshll.u32 [#allocation7], 4
      %s29 = int_to_ptr.vmem [resolvable:$true] %s28
      %34 = dma.hbm_to_vmem [thread:$0]  %s1, 2304, %s29, [#allocation8], 128, 128, 8
    $region9: #{tpu_custom_call.1} parent=1 // pred_fallthru
      _
    // Predicated region
    $region10: #{tpu_custom_call.1} parent=1 // pred_check
      _
    $region11: #{tpu_custom_call.1} parent=1 // pred_check_branch
      %36 = sbr.rel (0) target = $region13
    $region12: #{tpu_custom_call.1} parent=1 // pred_region
      %s38 = ssub.s32 256, 256
      %39 = vsyncadd [#allocation8], %s38
      %s40 = sshll.u32 [#allocation9], 4
      %s41 = int_to_ptr.vmem [resolvable:$true] %s40
      %46 = dma.hbm_to_vmem [thread:$0]  %s2, 256, %s41, [#allocation8], 128, 128, 8
    $region13: #{tpu_custom_call.1} parent=1 // pred_fallthru
      _
    // Predicated region
    $region14: #{tpu_custom_call.1} parent=1 // pred_check
      _
    $region15: #{tpu_custom_call.1} parent=1 // pred_check_branch
      %48 = sbr.rel (0) target = $region17
    $region16: #{tpu_custom_call.1} parent=1 // pred_region
      %s50 = ssub.s32 256, 256
      %51 = vsyncadd [#allocation11], %s50
      %s52 = sshll.u32 [#allocation10], 4
      %s53 = int_to_ptr.vmem [resolvable:$true] %s52
      %58 = dma.hbm_to_vmem [thread:$0]  %s3, 256, %s53, [#allocation11], 128, 128, 8
    $region17: #{tpu_custom_call.1} parent=1 // pred_fallthru
      _
    // Predicated region
    $region18: #{tpu_custom_call.1} parent=1 // pred_check
      _
    $region19: #{tpu_custom_call.1} parent=1 // pred_check_branch
      %60 = sbr.rel (0) target = $region21
    $region20: #{tpu_custom_call.1} parent=1 // pred_region
      %61 = dma.done [#allocation5], 128
    $region21: #{tpu_custom_call.1} parent=1 // pred_fallthru
      _
    // Predicated region
    $region22: #{tpu_custom_call.1} parent=1 // pred_check
      _
    $region23: #{tpu_custom_call.1} parent=1 // pred_check_branch
      %63 = sbr.rel (0) target = $region25
    $region24: #{tpu_custom_call.1} parent=1 // pred_region
      %64 = dma.done [#allocation8], 2304
    $region25: #{tpu_custom_call.1} parent=1 // pred_fallthru
      _
    // Predicated region
    $region26: #{tpu_custom_call.1} parent=1 // pred_check
      _
    $region27: #{tpu_custom_call.1} parent=1 // pred_check_branch
      %66 = sbr.rel (0) target = $region29
    $region28: #{tpu_custom_call.1} parent=1 // pred_region
      %67 = dma.done [#allocation8], 256
    $region29: #{tpu_custom_call.1} parent=1 // pred_fallthru
      _
    // Predicated region
    $region30: #{tpu_custom_call.1} parent=1 // pred_check
      _
    $region31: #{tpu_custom_call.1} parent=1 // pred_check_branch
      %69 = sbr.rel (0) target = $region33
    $region32: #{tpu_custom_call.1} parent=1 // pred_region
      %70 = dma.done [#allocation11], 256
    $region33: #{tpu_custom_call.1} parent=1 // pred_fallthru
      _
    %p71 = scmp.eq.s32.totalorder 0, 0
    // Predicated region
    $region34: #{tpu_custom_call.1} parent=1 // pred_check
      %p72 = pneg %p71
    $region35: #{tpu_custom_call.1} parent=1 // pred_check_branch
      %74 = sbr.rel (%p72) target = $region37
    $region36: #{tpu_custom_call.1} parent=1 // pred_region
      %v75 = vld [vmem:[#allocation9] sm:$0xff]
      %v76 = vld [vmem:[#allocation9 + $0x8] sm:$0xff]
      %vm77 = vcmask 261120
      %78 = vst.msk [vmem:[#allocation2] sm:$0xff] %vm77, %v75
      %79 = vst.msk [vmem:[#allocation2 + $0x8] sm:$0xff] %vm77, %v76
      %v80 = vld [vmem:[#allocation10] sm:$0xff]
      %v81 = vld [vmem:[#allocation10 + $0x8] sm:$0xff]
      %82 = vst.msk [vmem:[#allocation3] sm:$0xff] %vm77, %v80
      %83 = vst.msk [vmem:[#allocation3 + $0x8] sm:$0xff] %vm77, %v81
    $region37: #{tpu_custom_call.1} parent=1 // pred_fallthru
      _
    %v84 = vld [vmem:[#allocation7 + $0x60] sm:$0x3]
    %v85 = vlaneseq
    %v86 = vand.u32 %v85, 127
    %vm87 = vcmp.ge.s32.totalorder %v86, 64
    %vm88 = vcmp.lt.s32.totalorder %v86, 96
    %vm89 = vmand %vm87, %vm88
    %v90 = vld [vmem:[#allocation7] sm:$0xff]
    %v91 = vld [vmem:[#allocation7 + $0x8] sm:$0xff]
    %v92 = vld [vmem:[#allocation7 + $0x10] sm:$0xff]
    %v93 = vld [vmem:[#allocation7 + $0x18] sm:$0xff]
    %v94 = vld [vmem:[#allocation4] sm:$0xff]
    %v95 = vld [vmem:[#allocation2] sm:$0xff]
    %vm96 = vcmask 261120
    %v98 = vsel %vm96, %v95, 0
    %100 = vmatprep.subr.mxu0 0.0
    %101 = vmatpush1.msra.mxu0 %v90
    %102 = vmatprep.subr.mxu0 0.0
    %103 = vmatpush1.msra.mxu0 %v91
    %104 = vmatprep.subr.mxu0 0.0
    %105 = vmatpush1.msra.mxu0 %v92
    %106 = vmatprep.subr.mxu0 0.0
    %107 = vmatpush1.msra.mxu0 %v93
    %108 = vmatprep.subr.mxu0 0.0
    %109 = vmatpush1.msra.mxu0 0.0
    %110 = vmatprep.subr.mxu0 0.0
    %111 = vmatpush1.msra.mxu0 0.0
    %112 = vmatprep.subr.mxu0 0.0
    %113 = vmatpush1.msra.mxu0 0.0
    %114 = vmatprep.subr.mxu0 0.0
    %115 = vmatpush1.msra.mxu0 0.0
    %116 = vmatprep.subr.mxu0 0.0
    %117 = vmatpush1.msra.mxu0 0.0
    %118 = vmatprep.subr.mxu0 0.0
    %119 = vmatpush1.msra.mxu0 0.0
    %120 = vmatprep.subr.mxu0 0.0
    %121 = vmatpush1.msra.mxu0 0.0
    %122 = vmatprep.subr.mxu0 0.0
    %123 = vmatpush1.msra.mxu0 0.0
    %124 = vmatprep.subr.mxu0 0.0
    %125 = vmatpush1.msra.mxu0 0.0
    %126 = vmatprep.subr.mxu0 0.0
    %127 = vmatpush1.msra.mxu0 0.0
    %128 = vmatprep.subr.mxu0 0.0
    %129 = vmatpush1.msra.mxu0 0.0
    %130 = vmatprep.subr.mxu0 0.0
    %131 = vmatpush1.msra.mxu0 0.0
    %132 = vmatprep.subr.mxu0 0.0
    %133 = vmatpush1.msra.mxu0 0.0
    %134 = vmatprep.subr.mxu0 0.0
    %135 = vmatpush1.msra.mxu0 0.0
    %136 = vmatprep.subr.mxu0 0.0
    %137 = vmatpush1.msra.mxu0 0.0
    %138 = vmatprep.subr.mxu0 0.0
    %139 = vmatpush1.msra.mxu0 0.0
    %140 = vmatprep.subr.mxu0 0.0
    %141 = vmatpush1.msra.mxu0 0.0
    %142 = vmatprep.subr.mxu0 0.0
    %143 = vmatpush1.msra.mxu0 0.0
    %144 = vmatprep.subr.mxu0 0.0
    %145 = vmatpush1.msra.mxu0 0.0
    %146 = vmatprep.subr.mxu0 0.0
    %147 = vmatpush1.msra.mxu0 0.0
    %148 = vmatprep.subr.mxu0 0.0
    %149 = vmatpush1.msra.mxu0 0.0
    %150 = vmatprep.subr.mxu0 0.0
    %151 = vmatpush1.msra.mxu0 0.0
    %152 = vmatprep.subr.mxu0 0.0
    %153 = vmatpush1.msra.mxu0 0.0
    %154 = vmatprep.subr.mxu0 0.0
    %155 = vmatpush1.msra.mxu0 0.0
    %156 = vmatprep.subr.mxu0 0.0
    %157 = vmatpush1.msra.mxu0 0.0
    %158 = vmatprep.subr.mxu0 0.0
    %159 = vmatpush1.msra.mxu0 0.0
    %160 = vmatprep.subr.mxu0 0.0
    %161 = vmatpush1.msra.mxu0 0.0
    %162 = vmatprep.subr.mxu0 0.0
    %163 = vmatpush1.msra.mxu0 0.0
    %164 = vmatprep.mubr.f32.mxu0 0.0
    %165 = vmatmul.mubr.f32.gmra.mrb[0].mxu0 %v98
    %v166 = vpop.f32.mrb[0].mxu0
    %v167 = vadd.f32 0.0, %v166
    %v168 = vpop.f32.mrb[0].mxu0
    %169 = vdwg.mxu0
    %v170 = vadd.f32 %v94, %v167
    %v171 = vlaneseq
    %v172 = vshrl.u32 %v171, 7
    %v173 = vsub.s32 0, %v172
    %v174 = vrot.slane %v84, %v173
    %v175 = vadd.f32 %v170, %v174
    %v176 = vtanh.pop %v175
    %v177 = vmul.f32 %v176, 0.5
    %v178 = vadd.f32 %v177, 0.5
    %v179 = vsel %vm89, %v176, %v178
    %v180 = vld [vmem:[#allocation3] sm:$0xff]
    %182 = vrot.lane.b32.xlu0 %v180, 32
    %v183 = vpop.permute.xlu0 %182
    %v185 = vmul.f32 %v179, %v183
    %187 = vrot.lane.b32.xlu0 %v179, 64
    %v188 = vpop.permute.xlu0 %187
    %v190 = vmul.f32 %v179, %v188
    %192 = vrot.lane.b32.xlu0 %v190, 32
    %v193 = vpop.permute.xlu0 %192
    %v195 = vadd.f32 %v185, %v193
    %v196 = vtanh.pop %v195
    %198 = vrot.lane.b32.xlu0 %v196, 64
    %v199 = vpop.permute.xlu0 %198
    %v201 = vmul.f32 %v179, %v199
    %203 = vrot.lane.b32.xlu0 %v201, 32
    %v204 = vpop.permute.xlu0 %203
    %206 = vst.msk [vmem:[#allocation2] sm:$0xff] %vm96, %v204
    %208 = vrot.lane.b32.xlu0 %v195, 96
    %v209 = vpop.permute.xlu0 %208
    %211 = vst.msk [vmem:[#allocation3] sm:$0xff] %vm96, %v209
    %v212 = vld [vmem:[#allocation7 + $0x20] sm:$0xff]
    %v213 = vld [vmem:[#allocation7 + $0x28] sm:$0xff]
    %v214 = vld [vmem:[#allocation7 + $0x30] sm:$0xff]
    %v215 = vld [vmem:[#allocation7 + $0x38] sm:$0xff]
    %v216 = vld [vmem:[#allocation7 + $0x40] sm:$0xff]
    %v217 = vld [vmem:[#allocation7 + $0x48] sm:$0xff]
    %v218 = vld [vmem:[#allocation7 + $0x50] sm:$0xff]
    %v219 = vld [vmem:[#allocation7 + $0x58] sm:$0xff]
    %s220 = scalar_lea.vmem [#allocation2], 8
    %v221 = vld [vmem:[%s220] sm:$0xff]
    %v223 = vsel %vm96, %v221, 0
    %225 = vmatprep.subr.mxu0 0.0
    %226 = vmatpush1.msra.mxu0 %v216
    %227 = vmatprep.subr.mxu0 0.0
    %228 = vmatpush1.msra.mxu0 %v217
    %229 = vmatprep.subr.mxu0 0.0
    %230 = vmatpush1.msra.mxu0 %v218
    %231 = vmatprep.subr.mxu0 0.0
    %232 = vmatpush1.msra.mxu0 %v219
    %233 = vmatprep.subr.mxu0 0.0
    %234 = vmatpush1.msra.mxu0 0.0
    %235 = vmatprep.subr.mxu0 0.0
    %236 = vmatpush1.msra.mxu0 0.0
    %237 = vmatprep.subr.mxu0 0.0
    %238 = vmatpush1.msra.mxu0 0.0
    %239 = vmatprep.subr.mxu0 0.0
    %240 = vmatpush1.msra.mxu0 0.0
    %241 = vmatprep.subr.mxu0 0.0
    %242 = vmatpush1.msra.mxu0 0.0
    %243 = vmatprep.subr.mxu0 0.0
    %244 = vmatpush1.msra.mxu0 0.0
    %245 = vmatprep.subr.mxu0 0.0
    %246 = vmatpush1.msra.mxu0 0.0
    %247 = vmatprep.subr.mxu0 0.0
    %248 = vmatpush1.msra.mxu0 0.0
    %249 = vmatprep.subr.mxu0 0.0
    %250 = vmatpush1.msra.mxu0 0.0
    %251 = vmatprep.subr.mxu0 0.0
    %252 = vmatpush1.msra.mxu0 0.0
    %253 = vmatprep.subr.mxu0 0.0
    %254 = vmatpush1.msra.mxu0 0.0
    %255 = vmatprep.subr.mxu0 0.0
    %256 = vmatpush1.msra.mxu0 0.0
    %257 = vmatprep.subr.mxu0 0.0
    %258 = vmatpush1.msra.mxu0 0.0
    %259 = vmatprep.subr.mxu0 0.0
    %260 = vmatpush1.msra.mxu0 0.0
    %261 = vmatprep.subr.mxu0 0.0
    %262 = vmatpush1.msra.mxu0 0.0
    %263 = vmatprep.subr.mxu0 0.0
    %264 = vmatpush1.msra.mxu0 0.0
    %265 = vmatprep.subr.mxu0 0.0
    %266 = vmatpush1.msra.mxu0 0.0
    %267 = vmatprep.subr.mxu0 0.0
    %268 = vmatpush1.msra.mxu0 0.0
    %269 = vmatprep.subr.mxu0 0.0
    %270 = vmatpush1.msra.mxu0 0.0
    %271 = vmatprep.subr.mxu0 0.0
    %272 = vmatpush1.msra.mxu0 0.0
    %273 = vmatprep.subr.mxu0 0.0
    %274 = vmatpush1.msra.mxu0 0.0
    %275 = vmatprep.subr.mxu0 0.0
    %276 = vmatpush1.msra.mxu0 0.0
    %277 = vmatprep.subr.mxu0 0.0
    %278 = vmatpush1.msra.mxu0 0.0
    %279 = vmatprep.subr.mxu0 0.0
    %280 = vmatpush1.msra.mxu0 0.0
    %281 = vmatprep.subr.mxu0 0.0
    %282 = vmatpush1.msra.mxu0 0.0
    %283 = vmatprep.subr.mxu0 0.0
    %284 = vmatpush1.msra.mxu0 0.0
    %285 = vmatprep.subr.mxu0 0.0
    %286 = vmatpush1.msra.mxu0 0.0
    %287 = vmatprep.subr.mxu0 0.0
    %288 = vmatpush1.msra.mxu0 0.0
    %289 = vmatprep.mubr.f32.mxu0 0.0
    %290 = vmatmul.mubr.f32.gmra.mrb[0].mxu0 %v223
    %v291 = vpop.f32.mrb[0].mxu0
    %v292 = vadd.f32 0.0, %v291
    %v293 = vpop.f32.mrb[0].mxu0
    %294 = vdwg.mxu0
    %v295 = vsel %vm96, %v204, 0
    %297 = vmatprep.subr.mxu0 0.0
    %298 = vmatpush1.msra.mxu0 %v212
    %299 = vmatprep.subr.mxu0 0.0
    %300 = vmatpush1.msra.mxu0 %v213
    %301 = vmatprep.subr.mxu0 0.0
    %302 = vmatpush1.msra.mxu0 %v214
    %303 = vmatprep.subr.mxu0 0.0
    %304 = vmatpush1.msra.mxu0 %v215
    %305 = vmatprep.subr.mxu0 0.0
    %306 = vmatpush1.msra.mxu0 0.0
    %307 = vmatprep.subr.mxu0 0.0
    %308 = vmatpush1.msra.mxu0 0.0
    %309 = vmatprep.subr.mxu0 0.0
    %310 = vmatpush1.msra.mxu0 0.0
    %311 = vmatprep.subr.mxu0 0.0
    %312 = vmatpush1.msra.mxu0 0.0
    %313 = vmatprep.subr.mxu0 0.0
    %314 = vmatpush1.msra.mxu0 0.0
    %315 = vmatprep.subr.mxu0 0.0
    %316 = vmatpush1.msra.mxu0 0.0
    %317 = vmatprep.subr.mxu0 0.0
    %318 = vmatpush1.msra.mxu0 0.0
    %319 = vmatprep.subr.mxu0 0.0
    %320 = vmatpush1.msra.mxu0 0.0
    %321 = vmatprep.subr.mxu0 0.0
    %322 = vmatpush1.msra.mxu0 0.0
    %323 = vmatprep.subr.mxu0 0.0
    %324 = vmatpush1.msra.mxu0 0.0
    %325 = vmatprep.subr.mxu0 0.0
    %326 = vmatpush1.msra.mxu0 0.0
    %327 = vmatprep.subr.mxu0 0.0
    %328 = vmatpush1.msra.mxu0 0.0
    %329 = vmatprep.subr.mxu0 0.0
    %330 = vmatpush1.msra.mxu0 0.0
    %331 = vmatprep.subr.mxu0 0.0
    %332 = vmatpush1.msra.mxu0 0.0
    %333 = vmatprep.subr.mxu0 0.0
    %334 = vmatpush1.msra.mxu0 0.0
    %335 = vmatprep.subr.mxu0 0.0
    %336 = vmatpush1.msra.mxu0 0.0
    %337 = vmatprep.subr.mxu0 0.0
    %338 = vmatpush1.msra.mxu0 0.0
    %339 = vmatprep.subr.mxu0 0.0
    %340 = vmatpush1.msra.mxu0 0.0
    %341 = vmatprep.subr.mxu0 0.0
    %342 = vmatpush1.msra.mxu0 0.0
    %343 = vmatprep.subr.mxu0 0.0
    %344 = vmatpush1.msra.mxu0 0.0
    %345 = vmatprep.subr.mxu0 0.0
    %346 = vmatpush1.msra.mxu0 0.0
    %347 = vmatprep.subr.mxu0 0.0
    %348 = vmatpush1.msra.mxu0 0.0
    %349 = vmatprep.subr.mxu0 0.0
    %350 = vmatpush1.msra.mxu0 0.0
    %351 = vmatprep.subr.mxu0 0.0
    %352 = vmatpush1.msra.mxu0 0.0
    %353 = vmatprep.subr.mxu0 0.0
    %354 = vmatpush1.msra.mxu0 0.0
    %355 = vmatprep.subr.mxu0 0.0
    %356 = vmatpush1.msra.mxu0 0.0
    %357 = vmatprep.subr.mxu0 0.0
    %358 = vmatpush1.msra.mxu0 0.0
    %359 = vmatprep.subr.mxu0 0.0
    %360 = vmatpush1.msra.mxu0 0.0
    %361 = vmatprep.mubr.f32.mxu0 0.0
    %362 = vmatmul.mubr.f32.gmra.mrb[0].mxu0 %v295
    %v363 = vpop.f32.mrb[0].mxu0
    %v364 = vadd.f32 %v292, %v363
    %v365 = vpop.f32.mrb[0].mxu0
    %366 = vdwg.mxu0
    %v367 = vlaneseq
    %v368 = vshrl.u32 %v367, 7
    %v369 = vsub.s32 1, %v368
    %v370 = vrot.slane %v84, %v369
    %v371 = vadd.f32 %v364, %v370
    %v372 = vtanh.pop %v371
    %v373 = vmul.f32 %v372, 0.5
    %v374 = vadd.f32 %v373, 0.5
    %v375 = vsel %vm89, %v372, %v374
    %s376 = scalar_lea.vmem [#allocation3], 8
    %v377 = vld [vmem:[%s376] sm:$0xff]
    %379 = vrot.lane.b32.xlu0 %v377, 32
    %v380 = vpop.permute.xlu0 %379
    %v382 = vmul.f32 %v375, %v380
    %384 = vrot.lane.b32.xlu0 %v375, 64
    %v385 = vpop.permute.xlu0 %384
    %v387 = vmul.f32 %v375, %v385
    %389 = vrot.lane.b32.xlu0 %v387, 32
    %v390 = vpop.permute.xlu0 %389
    %v392 = vadd.f32 %v382, %v390
    %v393 = vtanh.pop %v392
    %395 = vrot.lane.b32.xlu0 %v393, 64
    %v396 = vpop.permute.xlu0 %395
    %v398 = vmul.f32 %v375, %v396
    %400 = vrot.lane.b32.xlu0 %v398, 32
    %v401 = vpop.permute.xlu0 %400
    %403 = vst.msk [vmem:[%s220] sm:$0xff] %vm96, %v401
    %405 = vrot.lane.b32.xlu0 %v392, 96
    %v406 = vpop.permute.xlu0 %405
    %408 = vst.msk [vmem:[%s376] sm:$0xff] %vm96, %v406
    %v409 = vld [vmem:[#allocation7 + $0x68] sm:$0xff]
    %v410 = vld [vmem:[#allocation7 + $0x70] sm:$0xff]
    %v411 = vld [vmem:[#allocation7 + $0x78] sm:$0xff]
    %v412 = vld [vmem:[#allocation7 + $0x80] sm:$0xff]
    %v413 = vld [vmem:[#allocation7 + $0x88] sm:$0x1]
    %v414 = vlaneseq
    %v415 = vshrl.u32 %v414, 7
    %v416 = vsub.s32 0, %v415
    %v417 = vrot.slane %v413, %v416
    %v418 = vsel %vm96, %v401, 0
    %420 = vmatprep.subr.mxu0 0.0
    %421 = vmatpush1.msra.mxu0 %v409
    %422 = vmatprep.subr.mxu0 0.0
    %423 = vmatpush1.msra.mxu0 %v410
    %424 = vmatprep.subr.mxu0 0.0
    %425 = vmatpush1.msra.mxu0 %v411
    %426 = vmatprep.subr.mxu0 0.0
    %427 = vmatpush1.msra.mxu0 %v412
    %428 = vmatprep.subr.mxu0 0.0
    %429 = vmatpush1.msra.mxu0 0.0
    %430 = vmatprep.subr.mxu0 0.0
    %431 = vmatpush1.msra.mxu0 0.0
    %432 = vmatprep.subr.mxu0 0.0
    %433 = vmatpush1.msra.mxu0 0.0
    %434 = vmatprep.subr.mxu0 0.0
    %435 = vmatpush1.msra.mxu0 0.0
    %436 = vmatprep.subr.mxu0 0.0
    %437 = vmatpush1.msra.mxu0 0.0
    %438 = vmatprep.subr.mxu0 0.0
    %439 = vmatpush1.msra.mxu0 0.0
    %440 = vmatprep.subr.mxu0 0.0
    %441 = vmatpush1.msra.mxu0 0.0
    %442 = vmatprep.subr.mxu0 0.0
    %443 = vmatpush1.msra.mxu0 0.0
    %444 = vmatprep.subr.mxu0 0.0
    %445 = vmatpush1.msra.mxu0 0.0
    %446 = vmatprep.subr.mxu0 0.0
    %447 = vmatpush1.msra.mxu0 0.0
    %448 = vmatprep.subr.mxu0 0.0
    %449 = vmatpush1.msra.mxu0 0.0
    %450 = vmatprep.subr.mxu0 0.0
    %451 = vmatpush1.msra.mxu0 0.0
    %452 = vmatprep.subr.mxu0 0.0
    %453 = vmatpush1.msra.mxu0 0.0
    %454 = vmatprep.subr.mxu0 0.0
    %455 = vmatpush1.msra.mxu0 0.0
    %456 = vmatprep.subr.mxu0 0.0
    %457 = vmatpush1.msra.mxu0 0.0
    %458 = vmatprep.subr.mxu0 0.0
    %459 = vmatpush1.msra.mxu0 0.0
    %460 = vmatprep.subr.mxu0 0.0
    %461 = vmatpush1.msra.mxu0 0.0
    %462 = vmatprep.subr.mxu0 0.0
    %463 = vmatpush1.msra.mxu0 0.0
    %464 = vmatprep.subr.mxu0 0.0
    %465 = vmatpush1.msra.mxu0 0.0
    %466 = vmatprep.subr.mxu0 0.0
    %467 = vmatpush1.msra.mxu0 0.0
    %468 = vmatprep.subr.mxu0 0.0
    %469 = vmatpush1.msra.mxu0 0.0
    %470 = vmatprep.subr.mxu0 0.0
    %471 = vmatpush1.msra.mxu0 0.0
    %472 = vmatprep.subr.mxu0 0.0
    %473 = vmatpush1.msra.mxu0 0.0
    %474 = vmatprep.subr.mxu0 0.0
    %475 = vmatpush1.msra.mxu0 0.0
    %476 = vmatprep.subr.mxu0 0.0
    %477 = vmatpush1.msra.mxu0 0.0
    %478 = vmatprep.subr.mxu0 0.0
    %479 = vmatpush1.msra.mxu0 0.0
    %480 = vmatprep.subr.mxu0 0.0
    %481 = vmatpush1.msra.mxu0 0.0
    %482 = vmatprep.subr.mxu0 0.0
    %483 = vmatpush1.msra.mxu0 0.0
    %484 = vmatprep.mubr.f32.mxu0 0.0
    %485 = vmatmul.mubr.f32.gmra.mrb[0].mxu0 %v418
    %v486 = vpop.f32.mrb[0].mxu0
    %v487 = vadd.f32 %v417, %v486
    %v488 = vpop.f32.mrb[0].mxu0
    %489 = vdwg.mxu0
    %490 = vrot.lane.b32.xlu0 %v398, 64
    %v491 = vpop.permute.xlu0 %490
    %493 = vrot.lane.b32.xlu0 %v195, 32
    %v494 = vpop.permute.xlu0 %493
    %496 = vrot.lane.b32.xlu0 %v392, 64
    %v497 = vpop.permute.xlu0 %496
    %v499 = vsel %vm96, %v204, %v491
    %vm500 = vcmask 523264
    %v501 = vsel %vm500, %v499, %v494
    %vm502 = vcmask 785408
    %v503 = vsel %vm502, %v501, %v497
    %504 = vst [vmem:[#allocation12] sm:$0xff] %v503
    %505 = vst [vmem:[#allocation12 + $0x8] sm:$0xff] %v487
    // Predicated region
    $region38: #{tpu_custom_call.1} parent=1 // pred_check
      _
    $region39: #{tpu_custom_call.1} parent=1 // pred_check_branch
      %507 = sbr.rel (0) target = $region41
    $region40: #{tpu_custom_call.1} parent=1 // pred_region
      %s509 = ssub.s32 256, 256
      %510 = vsyncadd [#allocation6], %s509
      %s512 = sshll.u32 [#allocation12], 4
      %s513 = int_to_ptr.vmem [resolvable:$true] %s512
      %515 = dma.vmem_to_hbm [thread:$0]  %s513, 256, %s4, [#allocation6]
    $region41: #{tpu_custom_call.1} parent=1 // pred_fallthru
      _
    // Predicated region
    $region42: #{tpu_custom_call.1} parent=1 // pred_check
      _
    $region43: #{tpu_custom_call.1} parent=1 // pred_check_branch
      %517 = sbr.rel (0) target = $region45
    $region44: #{tpu_custom_call.1} parent=1 // pred_region
      %518 = dma.done [#allocation6], 256
    $region45: #{tpu_custom_call.1} parent=1 // pred_fallthru
      _
    %519 = vsyncpa [#allocation5], 1
    %520 = vsyncpa [#allocation8], 1
    %521 = vsyncpa [#allocation11], 1
    %522 = vsyncpa [#allocation6], 1

</llo_original>
